<compile_context>
chip_gen: v5e
topology: v5e:2x2
jax: 0.10.0
libtpu: 0.0.40
codegen_flags: <defaults>
</compile_context>

<pallas_src>
import functools

import jax
import jax.numpy as jnp
from jax.experimental import pallas as pl
from jax.experimental.pallas import tpu as pltpu


def _sigmoid(z, fast):
    if fast:
        # exp -> EUP, approx reciprocal -> EUP; keeps the 4 VALU slots free.
        return pl.reciprocal(1.0 + jnp.exp(-z), approx=True)
    return jax.nn.sigmoid(z)


def _mlp_kernel_o1(x_ref, w1_ref, b1_ref, w2_ref, b2_ref, o_ref, *,
                   mxu_dtype, fast_sigmoid):
    """out_features == 1: MXU for fc1, VPU mul + lane reduction for fc4."""
    x = x_ref[...].astype(mxu_dtype)                           # (TB, F)
    # fc1: x @ W1t (+ b1); W1t is pre-transposed [in, out] so the RHS
    # contraction dim sits on sublanes (no per-step weight relayout).
    h = jnp.dot(x, w1_ref[...], preferred_element_type=jnp.float32)
    h = _sigmoid(h + b1_ref[...], fast_sigmoid)                # f32 activations
    # fc4 with a single output unit: VPU multiply + lane reduce.
    y = jnp.sum(h * w2_ref[...], axis=-1) + b2_ref[0]          # (TB,)
    # Lane-dense store: output block is (1, TB) with batch on the lane axis.
    o_ref[...] = y[None, :].astype(o_ref.dtype)


def _mlp_kernel_general(x_ref, w1_ref, b1_ref, w2_ref, b2_ref, o_ref, *,
                        mxu_dtype, fast_sigmoid):
    """General out_features > 1 path (weights pre-transposed to [in, out])."""
    x = x_ref[...].astype(mxu_dtype)
    h = jnp.dot(x, w1_ref[...], preferred_element_type=jnp.float32)
    h = _sigmoid(h + b1_ref[...], fast_sigmoid)
    y = jnp.dot(h.astype(mxu_dtype), w2_ref[...],
                preferred_element_type=jnp.float32)
    o_ref[...] = (y + b2_ref[...]).astype(o_ref.dtype)


def prices_neural_net_forward(x, w1, b1, w2, b2, *, block_b=1024,
                              min_grid_steps=1, mxu_dtype=jnp.float32,
                              fast_sigmoid=False):
    """Fused forward pass.

    x: [B, F]; w1: [F, F] (PyTorch [out, in]); b1: [F]; w2: [O, F]; b2: [O].
    mxu_dtype / fast_sigmoid: set jnp.bfloat16 / True on v6e/v7x production
    runs (validate with a relaxed tolerance); defaults keep exact f32 math.
    min_grid_steps: set 2 on v7x so both TensorCores get "parallel" steps.
    """
    B, F = x.shape
    O, F2 = w2.shape
    assert F2 == F and w1.shape == (F, F) and b1.shape == (F,) and b2.shape == (O,)
    assert block_b % 128 == 0, "block_b must be a multiple of 128"

    # --- one-time weight prep (amortized across grid steps / calls) ---------
    w1_t = jnp.asarray(w1.T, dtype=mxu_dtype)        # [in, out] for the MXU
    b1_2d = b1.reshape(1, F).astype(jnp.float32)

    # --- batch tile selection ------------------------------------------------
    if B > block_b:
        TB = block_b
    elif min_grid_steps > 1 and B >= 128 * min_grid_steps:
        # keep TB a multiple of 128 so the lane-dense (1, TB) output block
        # stays an unmasked full-width store.
        TB = min(((pl.cdiv(B, min_grid_steps) + 127) // 128) * 128, block_b)
    else:
        TB = B                                       # single-step grid (demo regime)
    nb = pl.cdiv(B, TB)

    VMEM = pltpu.MemorySpace.VMEM
    SMEM = pltpu.MemorySpace.SMEM

    def resident(shape):
        # Grid-invariant full-array block kept in VMEM across all batch steps.
        # TODO(synk): request pipeline_mode=pl.Buffered(1) here (never
        # re-fetched, so no double-buffer needed) once supported here.
        return pl.BlockSpec(shape, lambda i: (0, 0), memory_space=VMEM)

    itemsize = jnp.dtype(mxu_dtype).itemsize
    w2_bytes = F * 4 if O == 1 else F * O * itemsize
    resident_bytes = F * F * itemsize + F * 4 + w2_bytes + O * 4
    stream_bytes = 2 * TB * F * 4 + 2 * TB * max(O, 1) * 4       # dbl-buffered tiles
    vmem_needed = 2 * resident_bytes + stream_bytes
    vmem_limit = int(min(64 * 2**20, max(32 * 2**20, vmem_needed + (4 << 20))))

    compiler_params = pltpu.CompilerParams(
        dimension_semantics=("parallel",),           # shard batch steps across TCs (v7x)
        vmem_limit_bytes=vmem_limit)

    cost = pl.CostEstimate(
        flops=2 * B * F * F + 2 * B * F * O,
        transcendentals=B * F,                       # one exp per hidden activation
        bytes_accessed=int(x.size * x.dtype.itemsize + F * F * itemsize
                           + F * 4 + w2_bytes + O * 4
                           + B * O * x.dtype.itemsize))

    if O == 1:
        kernel = functools.partial(_mlp_kernel_o1, mxu_dtype=mxu_dtype,
                                   fast_sigmoid=fast_sigmoid)
        out = pl.pallas_call(
            kernel,
            out_shape=jax.ShapeDtypeStruct((1, B), x.dtype),
            grid=(nb,),
            in_specs=[
                pl.BlockSpec((TB, F), lambda i: (i, 0), memory_space=VMEM),  # x tile
                resident((F, F)),                                            # W1^T [in,out]
                resident((1, F)),                                            # b1
                resident((1, F)),                                            # W2 row (f32, VPU path)
                pl.BlockSpec(memory_space=SMEM),                             # b2 scalar
            ],
            out_specs=pl.BlockSpec((1, TB), lambda i: (0, i), memory_space=VMEM),
            compiler_params=compiler_params,
            cost_estimate=cost,
        )(x, w1_t, b1_2d, w2.astype(jnp.float32), b2.astype(jnp.float32))
        return out.reshape(B, 1)

    # General out_features > 1 fallback.
    w2_t = jnp.asarray(w2.T, dtype=mxu_dtype)        # [in, out]
    kernel = functools.partial(_mlp_kernel_general, mxu_dtype=mxu_dtype,
                               fast_sigmoid=fast_sigmoid)
    return pl.pallas_call(
        kernel,
        out_shape=jax.ShapeDtypeStruct((B, O), x.dtype),
        grid=(nb,),
        in_specs=[
            pl.BlockSpec((TB, F), lambda i: (i, 0), memory_space=VMEM),  # x tile
            resident((F, F)),                                            # W1^T
            resident((1, F)),                                            # b1
            resident((F, O)),                                            # W2^T
            resident((1, O)),                                            # b2
        ],
        out_specs=pl.BlockSpec((TB, O), lambda i: (i, 0), memory_space=VMEM),
        compiler_params=compiler_params,
        cost_estimate=cost,
    )(x, w1_t, b1_2d, w2_t, b2.reshape(1, O).astype(jnp.float32))


def _reference(x, w1, b1, w2, b2):
    h = jax.nn.sigmoid(x @ w1.T + b1)
    return h @ w2.T + b2


if __name__ == "__main__":
    key = jax.random.PRNGKey(0)
    keys = jax.random.split(key, 12)

    # Demo shape implied by the module: batch=8, in_features=32, out_features=1.
    B, F, O = 8, 32, 1
    bound = 1.0 / jnp.sqrt(jnp.float32(F))
    w1 = jax.random.uniform(keys[0], (F, F), jnp.float32, -bound, bound)  # fc1 weight [out, in]
    b1 = jax.random.uniform(keys[1], (F,), jnp.float32, -bound, bound)    # fc1 bias
    w2 = jax.random.uniform(keys[2], (O, F), jnp.float32, -bound, bound)  # fc4 weight [out, in]
    b2 = jax.random.uniform(keys[3], (O,), jnp.float32, -bound, bound)    # fc4 bias
    x = jax.random.normal(keys[4], (B, F), jnp.float32)

    ref = _reference(x, w1, b1, w2, b2)

    # 1) exact f32 path (strict check against the PyTorch-equivalent reference).
    out = jax.block_until_ready(prices_neural_net_forward(x, w1, b1, w2, b2))
    assert out.shape == (B, O), out.shape
    assert jnp.allclose(out, ref, atol=1e-5, rtol=1e-5), "f32 mismatch vs reference"

    # 2) bf16-MXU + EUP approx-sigmoid fast path (v6e/v7x production config).
    out_fast = jax.block_until_ready(
        prices_neural_net_forward(x, w1, b1, w2, b2,
                                  mxu_dtype=jnp.bfloat16, fast_sigmoid=True))
    assert jnp.allclose(out_fast, ref, atol=1e-1, rtol=1e-1), "bf16 fast path drifted"

    # 3) multi-step batch grid (exercises tiling + lane-dense (1, TB) stores).
    B2, F2 = 256, 64
    bound2 = 1.0 / jnp.sqrt(jnp.float32(F2))
    w1b = jax.random.uniform(keys[5], (F2, F2), jnp.float32, -bound2, bound2)
    b1b = jax.random.uniform(keys[6], (F2,), jnp.float32, -bound2, bound2)
    w2b = jax.random.uniform(keys[7], (1, F2), jnp.float32, -bound2, bound2)
    b2b = jax.random.uniform(keys[8], (1,), jnp.float32, -bound2, bound2)
    x2 = jax.random.normal(keys[9], (B2, F2), jnp.float32)
    out2 = jax.block_until_ready(
        prices_neural_net_forward(x2, w1b, b1b, w2b, b2b, block_b=128))
    assert jnp.allclose(out2, _reference(x2, w1b, b1b, w2b, b2b),
                        atol=1e-4, rtol=1e-4), "tiled-path mismatch"

    # 4) general out_features > 1 path (supported, not the module default).
    O3 = 4
    w2c = jax.random.uniform(keys[10], (O3, F), jnp.float32, -bound, bound)
    b2c = jax.random.uniform(keys[11], (O3,), jnp.float32, -bound, bound)
    out3 = jax.block_until_ready(prices_neural_net_forward(x, w1, b1, w2c, b2c))
    assert jnp.allclose(out3, _reference(x, w1, b1, w2c, b2c),
                        atol=1e-5, rtol=1e-5), "general-path mismatch"

    print("KERNEL_OK")
</pallas_src>

<mosaic_0001>
module attributes {stable_mosaic.version = 11 : i64} {
  func.func @_mlp_kernel_o1(%arg0: i32, %arg1: memref<8x32xf32, #tpu.memory_space<vmem>>, %arg2: memref<32x32xf32, #tpu.memory_space<vmem>>, %arg3: memref<1x32xf32, #tpu.memory_space<vmem>>, %arg4: memref<1x32xf32, #tpu.memory_space<vmem>>, %arg5: memref<1xf32, #tpu.memory_space<smem>>, %arg6: memref<1x8xf32, #tpu.memory_space<vmem>>) attributes {dimension_semantics = [#tpu.dimension_semantics<parallel>], iteration_bounds = array<i64: 1>, scalar_prefetch = 0 : i64, scratch_operands = 0 : i64, tpu.core_type = #tpu.core_type<tc>, window_params = [{transform_indices = @transform_0, window_bounds = array<i64: 8, 32>}, {pipeline_mode = #tpu.pipeline_mode<synchronous>, transform_indices = @transform_1, window_bounds = array<i64: 32, 32>}, {pipeline_mode = #tpu.pipeline_mode<synchronous>, transform_indices = @transform_2, window_bounds = array<i64: 1, 32>}, {pipeline_mode = #tpu.pipeline_mode<synchronous>, transform_indices = @transform_3, window_bounds = array<i64: 1, 32>}, {transform_indices = @transform_4, window_bounds = array<i64: 1>}, {transform_indices = @transform_5, window_bounds = array<i64: 1, 8>}]} {
    %c0 = arith.constant 0 : index
    %c0_0 = arith.constant 0 : index
    %0 = vector.load %arg1[%c0, %c0_0] : memref<8x32xf32, #tpu.memory_space<vmem>>, vector<8x32xf32>
    %c0_1 = arith.constant 0 : index
    %c0_2 = arith.constant 0 : index
    %1 = vector.load %arg2[%c0_1, %c0_2] : memref<32x32xf32, #tpu.memory_space<vmem>>, vector<32x32xf32>
    %cst = arith.constant dense<0.000000e+00> : vector<8x32xf32>
    %2 = tpu.matmul %0, %1, %cst {dimension_numbers = #tpu.dot_dimension_numbers<[1], [0], [0], [1], [0, 0, 1, 1], [], []>} : vector<8x32xf32>, vector<32x32xf32>, vector<8x32xf32> -> vector<8x32xf32>
    %c0_3 = arith.constant 0 : index
    %c0_4 = arith.constant 0 : index
    %3 = vector.load %arg3[%c0_3, %c0_4] : memref<1x32xf32, #tpu.memory_space<vmem>>, vector<1x32xf32>
    %4 = vector.broadcast %3 : vector<1x32xf32> to vector<8x32xf32>
    %5 = arith.addf %2, %4 : vector<8x32xf32>
    %6 = arith.negf %5 : vector<8x32xf32>
    %7 = math.exp %6 : vector<8x32xf32>
    %cst_5 = arith.constant 1.000000e+00 : f32
    %8 = vector.broadcast %cst_5 : f32 to vector<8x32xf32>
    %9 = arith.addf %8, %7 : vector<8x32xf32>
    %10 = arith.divf %8, %9 : vector<8x32xf32>
    %c0_6 = arith.constant 0 : index
    %c0_7 = arith.constant 0 : index
    %11 = vector.load %arg4[%c0_6, %c0_7] : memref<1x32xf32, #tpu.memory_space<vmem>>, vector<1x32xf32>
    %12 = vector.broadcast %11 : vector<1x32xf32> to vector<8x32xf32>
    %13 = arith.mulf %10, %12 : vector<8x32xf32>
    %cst_8 = arith.constant dense<0.000000e+00> : vector<8xf32>
    %14 = vector.multi_reduction <add>, %13, %cst_8 [1] : vector<8x32xf32> to vector<8xf32>
    %c0_9 = arith.constant 0 : index
    %15 = memref.load %arg5[%c0_9] : memref<1xf32, #tpu.memory_space<smem>>
    %16 = vector.broadcast %15 : f32 to vector<8xf32>
    %17 = arith.addf %14, %16 : vector<8xf32>
    %18 = vector.shape_cast %17 : vector<8xf32> to vector<1x8xf32>
    %c0_10 = arith.constant 0 : index
    %c0_11 = arith.constant 0 : index
    %19 = vector.load %arg6[%c0_10, %c0_11] : memref<1x8xf32, #tpu.memory_space<vmem>>, vector<1x8xf32>
    tpu.vector_store %arg6[%c0_10, %c0_11], %18 {strides = array<i32>} : memref<1x8xf32, #tpu.memory_space<vmem>>, vector<1x8xf32>,
    return
  }
  func.func @transform_0(%arg0: i32) -> (i32, i32) {
    %c0_i32 = arith.constant 0 : i32
    %c0_i32_0 = arith.constant 0 : i32
    return %arg0, %c0_i32 : i32, i32
  }
  func.func @transform_1(%arg0: i32) -> (i32, i32) {
    %c0_i32 = arith.constant 0 : i32
    %c0_i32_0 = arith.constant 0 : i32
    %c0_i32_1 = arith.constant 0 : i32
    return %c0_i32, %c0_i32_0 : i32, i32
  }
  func.func @transform_2(%arg0: i32) -> (i32, i32) {
    %c0_i32 = arith.constant 0 : i32
    %c0_i32_0 = arith.constant 0 : i32
    %c0_i32_1 = arith.constant 0 : i32
    return %c0_i32, %c0_i32_0 : i32, i32
  }
  func.func @transform_3(%arg0: i32) -> (i32, i32) {
    %c0_i32 = arith.constant 0 : i32
    %c0_i32_0 = arith.constant 0 : i32
    %c0_i32_1 = arith.constant 0 : i32
    return %c0_i32, %c0_i32_0 : i32, i32
  }
  func.func @transform_4(%arg0: i32) -> i32 {
    %c0_i32 = arith.constant 0 : i32
    %c0_i32_0 = arith.constant 0 : i32
    return %c0_i32 : i32
  }
  func.func @transform_5(%arg0: i32) -> (i32, i32) {
    %c0_i32 = arith.constant 0 : i32
    %c0_i32_0 = arith.constant 0 : i32
    return %c0_i32, %arg0 : i32, i32
  }
}

</mosaic_0001>

<llo_original>
// kernel: tpu_custom_call.1
$region0: #{tpu_custom_call.1}
  #allocation0 [shape = 'u32[]', space=smem, size = 0x4, offset = 0x4, fixed_abs, tag = 'smem constant byte address 0x4 - core index']
  #allocation1 [shape = 'u32[72,128]{1,0:T(1,128)}', space=vmem, size = 0x9000, scoped, tag = 'internal scratch']
  #allocation2 [shape = 'f32[1]{0:T(128)S(6)}', space=smem, size = 0x200, scoped, tag = 'scoped memory for tpu_custom_call.1']
  %s0 = inlined_call_operand.hbm [shape: f32[8,32], index: 0, kind: input, shape index: {}]
  %s1 = inlined_call_operand.hbm [shape: f32[32,32], index: 1, kind: input, shape index: {}]
  %s2 = inlined_call_operand.vmem [shape: f32[1,32], index: 2, kind: input, shape index: {}]
  %s3 = inlined_call_operand.vmem [shape: f32[1,32], index: 3, kind: input, shape index: {}]
  %s4 = inlined_call_operand.<no memory space> [shape: f32[1], index: 4, kind: input, shape index: {}]
  %s5 = inlined_call_operand.hbm [shape: f32[1,8], index: 5, kind: output, shape index: {}]
  %s6 = sld [smem:[#allocation0]]
  $region38: #{tpu_custom_call.1} parent=0
    _
  %s8 = ssub.s32 1, %s6
  %s9 = scalar_select 0, %s8, %s6
  %10 = sst [smem:[#allocation2]] %s4
  $region1: #{tpu_custom_call.1} parent=0
    #allocation3 [shape = 'u8[4096]{0}', space=vmem, size = 0x1000, scoped, tag = 'input window, operand 0, single buffered']
    #allocation4 [shape = 's32[1]{0}', space=sflag, size = 0x4, scoped, tag = 'scoped memory for tpu_custom_call.1']
    #allocation5 [shape = 's32[1]{0}', space=sflag, size = 0x4, scoped, tag = 'scoped memory for tpu_custom_call.1']
    #allocation6 [shape = 'u8[16384]{0}', space=vmem, size = 0x4000, scoped, tag = 'input window, operand 1, single buffered']
    #allocation7 [shape = 's32[1]{0}', space=sflag, size = 0x4, scoped, tag = 'scoped memory for tpu_custom_call.1']
    #allocation8 [shape = 'u8[512]{0}', space=vmem, size = 0x400, scoped, tag = 'output window, operand 0, single buffered']
    %11 = vsyncpa [#allocation4], 0
    %12 = vsyncpa [#allocation7], 0
    %13 = vsyncpa [#allocation5], 0
    // Predicated region
    $region2: #{tpu_custom_call.1} parent=1 // pred_check
      _
    $region3: #{tpu_custom_call.1} parent=1 // pred_check_branch
      %15 = sbr.rel (0) target = $region5
    $region4: #{tpu_custom_call.1} parent=1 // pred_region
      %17 = vsyncadd [#allocation4], 0
      %s19 = sshll.u32 %s0, 4
      %s20 = int_to_ptr.hbm [resolvable:$true] %s19
      %s21 = sshll.u32 [#allocation3], 4
      %s22 = int_to_ptr.vmem [resolvable:$true] %s21
      %24 = dma.hbm_to_vmem [thread:$0]  %s20, 128, %s22, [#allocation4]
    $region5: #{tpu_custom_call.1} parent=1 // pred_fallthru
      _
    // Predicated region
    $region6: #{tpu_custom_call.1} parent=1 // pred_check
      _
    $region7: #{tpu_custom_call.1} parent=1 // pred_check_branch
      %26 = sbr.rel (0) target = $region9
    $region8: #{tpu_custom_call.1} parent=1 // pred_region
      %28 = vsyncadd [#allocation7], 0
      %s29 = sshll.u32 %s1, 4
      %s30 = int_to_ptr.hbm [resolvable:$true] %s29
      %s31 = sshll.u32 [#allocation6], 4
      %s32 = int_to_ptr.vmem [resolvable:$true] %s31
      %37 = dma.hbm_to_vmem [thread:$0]  %s30, 512, %s32, [#allocation7], 128, 128, 8
    $region9: #{tpu_custom_call.1} parent=1 // pred_fallthru
      _
    // Predicated region
    $region10: #{tpu_custom_call.1} parent=1 // pred_check
      _
    $region11: #{tpu_custom_call.1} parent=1 // pred_check_branch
      %39 = sbr.rel (0) target = $region13
    $region12: #{tpu_custom_call.1} parent=1 // pred_region
      _
    $region13: #{tpu_custom_call.1} parent=1 // pred_fallthru
      _
    // Predicated region
    $region14: #{tpu_custom_call.1} parent=1 // pred_check
      _
    $region15: #{tpu_custom_call.1} parent=1 // pred_check_branch
      %41 = sbr.rel (0) target = $region17
    $region16: #{tpu_custom_call.1} parent=1 // pred_region
      _
    $region17: #{tpu_custom_call.1} parent=1 // pred_fallthru
      _
    // Predicated region
    $region18: #{tpu_custom_call.1} parent=1 // pred_check
      _
    $region19: #{tpu_custom_call.1} parent=1 // pred_check_branch
      %43 = sbr.rel (0) target = $region21
    $region20: #{tpu_custom_call.1} parent=1 // pred_region
      _
    $region21: #{tpu_custom_call.1} parent=1 // pred_fallthru
      _
    // Predicated region
    $region22: #{tpu_custom_call.1} parent=1 // pred_check
      _
    $region23: #{tpu_custom_call.1} parent=1 // pred_check_branch
      %45 = sbr.rel (0) target = $region25
    $region24: #{tpu_custom_call.1} parent=1 // pred_region
      %47 = dma.done [#allocation4], 128
    $region25: #{tpu_custom_call.1} parent=1 // pred_fallthru
      _
    // Predicated region
    $region26: #{tpu_custom_call.1} parent=1 // pred_check
      _
    $region27: #{tpu_custom_call.1} parent=1 // pred_check_branch
      %49 = sbr.rel (0) target = $region29
    $region28: #{tpu_custom_call.1} parent=1 // pred_region
      %51 = dma.done [#allocation7], 512
    $region29: #{tpu_custom_call.1} parent=1 // pred_fallthru
      _
    %v52 = vld [vmem:[#allocation3] sm:$0xff]
    %v53 = vld [vmem:[#allocation6] sm:$0xff]
    %v54 = vld [vmem:[#allocation6 + $0x8] sm:$0xff]
    %v55 = vld [vmem:[#allocation6 + $0x10] sm:$0xff]
    %v56 = vld [vmem:[#allocation6 + $0x18] sm:$0xff]
    %v57 = vld [vmem:[%s2] sm:$0x1]
    %v59 = vperm.slane %v57, 0
    %vm61 = vcmask 261120
    %v63 = vsel %vm61, %v52, 0
    %65 = vmatpush.msra.mxu0 0.0
    %66 = vmatpush.msra.mxu0 0.0
    %67 = vmatpush.msra.mxu0 0.0
    %68 = vmatpush.msra.mxu0 0.0
    %69 = vmatpush.msra.mxu0 0.0
    %70 = vmatpush.msra.mxu0 0.0
    %71 = vmatpush.msra.mxu0 0.0
    %72 = vmatpush.msra.mxu0 0.0
    %73 = vmatpush.msra.mxu0 0.0
    %74 = vmatpush.msra.mxu0 0.0
    %75 = vmatpush.msra.mxu0 0.0
    %76 = vmatpush.msra.mxu0 0.0
    %77 = vmatpush.msra.mxu0 %v56
    %78 = vmatpush.msra.mxu0 %v55
    %79 = vmatpush.msra.mxu0 %v54
    %80 = vmatpush.msra.mxu0 %v53
    %81 = vmatmul.f32.gmra.mxu0 %v63
    %v82 = vpop.f32.mrf.mxu0
    %v83 = vadd.f32 %v59, %v82
    %84 = vdwg.mxu0
    %v85 = vxor.u32 %v83, 2147483648
    %v86 = vmul.f32 %v85, 1.442695
    %v87 = vpow.pop %v86
    %v88 = vadd.f32 %v87, 1.0
    %v89 = vrcp.pop %v88
    %v90 = vmul.f32 %v88, %v89
    %v91 = vsub.f32 1.0, %v90
    %v92 = vmul.f32 %v89, %v91
    %v93 = vadd.f32 %v89, %v92
    %vm94 = vweird.f32 %v88
    %vm95 = vweird.f32 %v89
    %vm96 = vmor %vm94, %vm95
    %v97 = vsel %vm96, %v89, %v93
    %v98 = vand.u32 2147483647, %v88
    %vm99 = vcmp.eq.f32.partialorder %v98, 8.507059e+37
    %v100 = vand.u32 %v88, 2147483648
    %v101 = vor.u32 1.1754944e-38, %v100
    %v102 = vsel %vm99, %v101, %v97
    %v103 = vmul.f32 1.0, %v102
    %v104 = vld [vmem:[%s3] sm:$0x1]
    %v106 = vperm.slane %v104, 0
    %v108 = vmul.f32 %v103, %v106
    %v109 = vsel %vm61, %v108, 0.0
    %110 = vadd.xlane.f32.xlu0 %v109
    %v111 = vpop.xlane.xlu0 %110
    %s112 = sld [smem:[#allocation2]]
    %v113 = vstv %s112
    %v114 = vadd.f32 %v111, %v113
    %v116 = vlaneseq
    %v117 = vand.u32 %v116, 127
    %v118 = vperm.slane %v114, %v117
    %vm120 = vcmask 57344
    %121 = vst.msk [vmem:[#allocation8] sm:$0x1] %vm120, %v118
    // Predicated region
    $region30: #{tpu_custom_call.1} parent=1 // pred_check
      _
    $region31: #{tpu_custom_call.1} parent=1 // pred_check_branch
      %123 = sbr.rel (0) target = $region33
    $region32: #{tpu_custom_call.1} parent=1 // pred_region
      %125 = vsyncadd [#allocation5], 0
      %s127 = sshll.u32 [#allocation8], 4
      %s128 = int_to_ptr.vmem [resolvable:$true] %s127
      %s129 = sshll.u32 %s5, 4
      %s130 = int_to_ptr.hbm [resolvable:$true] %s129
      %132 = dma.vmem_to_hbm [thread:$0]  %s128, 16, %s130, [#allocation5]
    $region33: #{tpu_custom_call.1} parent=1 // pred_fallthru
      _
    // Predicated region
    $region34: #{tpu_custom_call.1} parent=1 // pred_check
      _
    $region35: #{tpu_custom_call.1} parent=1 // pred_check_branch
      %134 = sbr.rel (0) target = $region37
    $region36: #{tpu_custom_call.1} parent=1 // pred_region
      %136 = dma.done [#allocation5], 16
    $region37: #{tpu_custom_call.1} parent=1 // pred_fallthru
      _
    %137 = vsyncpa [#allocation4], 1
    %138 = vsyncpa [#allocation7], 1
    %139 = vsyncpa [#allocation5], 1

</llo_original>
